<compile_context>
chip_gen: v5e
topology: v5e:2x2
jax: 0.10.0
libtpu: 0.0.40
codegen_flags: <defaults>
</compile_context>

<pallas_src>
import jax
import jax.numpy as jnp
from jax.experimental import pallas as pl
from jax.experimental.pallas import tpu as pltpu

_LANES = 512        # lane-dense last dim (multiple of 128)
_TILE_ROWS = 1024   # rows per grid step -> 1024*512*4B = 2 MiB per f32 tile


def _add5_mul2_kernel(x_ref, o_ref):
    # Pure VPU elementwise op on the whole tile; dtype-generic constants.
    o_ref[...] = (x_ref[...] + 5) * 2


def add5_mul2(x):
    """Computes (x + 5) * 2 elementwise via a tiled, pipelined Pallas TPU kernel."""
    orig_shape = x.shape
    orig_dtype = x.dtype
    total = x.size
    flat = x.reshape(total)

    # Lane-dense reshape: (rows_padded, _LANES). Pad the tail in the wrapper.
    rows = pl.cdiv(total, _LANES)
    # For small inputs shrink the tile (rows multiple of 8 to satisfy (8,128) tiling).
    tile_rows = _TILE_ROWS if rows >= _TILE_ROWS else ((rows + 7) // 8) * 8
    rows_padded = ((rows + tile_rows - 1) // tile_rows) * tile_rows
    padded_total = rows_padded * _LANES
    if padded_total != total:
        flat = jnp.pad(flat, (0, padded_total - total))
    x2d = flat.reshape(rows_padded, _LANES)

    grid = (rows_padded // tile_rows,)

    out2d = pl.pallas_call(
        _add5_mul2_kernel,
        out_shape=jax.ShapeDtypeStruct((rows_padded, _LANES), orig_dtype),
        grid_spec=pl.GridSpec(
            grid=grid,
            in_specs=[pl.BlockSpec((tile_rows, _LANES), lambda i: (i, 0))],
            out_specs=pl.BlockSpec((tile_rows, _LANES), lambda i: (i, 0)),
        ),
        compiler_params=pltpu.CompilerParams(
            dimension_semantics=("parallel",)  # lets v7x shard across both TCs
        ),
    )(x2d)

    out_flat = out2d.reshape(padded_total)
    if padded_total != total:
        out_flat = out_flat[:total]
    return out_flat.reshape(orig_shape)


if __name__ == "__main__":
    key = jax.random.PRNGKey(0)
    # Small NCHW input consistent with a generic 4D tensor module.
    x = jax.random.normal(key, (2, 4, 16, 16), dtype=jnp.float32)

    out = add5_mul2(x)
    jax.block_until_ready(out)

    # Reference check (plain JAX).
    ref = (x + 5.0) * 2.0
    assert out.shape == x.shape
    assert out.dtype == x.dtype
    assert jnp.allclose(out, ref, atol=1e-6), "mismatch vs reference"

    print("KERNEL_OK")
</pallas_src>

<mosaic_0001>
module attributes {stable_mosaic.version = 11 : i64} {
  func.func @_add5_mul2_kernel(%arg0: i32, %arg1: memref<8x512xf32, #tpu.memory_space<vmem>>, %arg2: memref<8x512xf32, #tpu.memory_space<vmem>>) attributes {dimension_semantics = [#tpu.dimension_semantics<parallel>], iteration_bounds = array<i64: 1>, scalar_prefetch = 0 : i64, scratch_operands = 0 : i64, tpu.core_type = #tpu.core_type<tc>, window_params = [{transform_indices = @transform_0, window_bounds = array<i64: 8, 512>}, {transform_indices = @transform_1, window_bounds = array<i64: 8, 512>}]} {
    %c0 = arith.constant 0 : index
    %c0_0 = arith.constant 0 : index
    %0 = vector.load %arg1[%c0, %c0_0] : memref<8x512xf32, #tpu.memory_space<vmem>>, vector<8x512xf32>
    %cst = arith.constant 5.000000e+00 : f32
    %1 = vector.broadcast %cst : f32 to vector<8x512xf32>
    %2 = arith.addf %0, %1 : vector<8x512xf32>
    %cst_1 = arith.constant 2.000000e+00 : f32
    %3 = vector.broadcast %cst_1 : f32 to vector<8x512xf32>
    %4 = arith.mulf %2, %3 : vector<8x512xf32>
    %c0_2 = arith.constant 0 : index
    %c0_3 = arith.constant 0 : index
    %5 = vector.load %arg2[%c0_2, %c0_3] : memref<8x512xf32, #tpu.memory_space<vmem>>, vector<8x512xf32>
    tpu.vector_store %arg2[%c0_2, %c0_3], %4 {strides = array<i32>} : memref<8x512xf32, #tpu.memory_space<vmem>>, vector<8x512xf32>,
    return
  }
  func.func @transform_0(%arg0: i32) -> (i32, i32) {
    %c0_i32 = arith.constant 0 : i32
    %c0_i32_0 = arith.constant 0 : i32
    return %arg0, %c0_i32 : i32, i32
  }
  func.func @transform_1(%arg0: i32) -> (i32, i32) {
    %c0_i32 = arith.constant 0 : i32
    %c0_i32_0 = arith.constant 0 : i32
    return %arg0, %c0_i32 : i32, i32
  }
}

</mosaic_0001>

<llo_original>
// kernel: tpu_custom_call.1
$region0: #{tpu_custom_call.1}
  #allocation0 [shape = 'u32[]', space=smem, size = 0x4, offset = 0x4, fixed_abs, tag = 'smem constant byte address 0x4 - core index']
  #allocation1 [shape = 'u32[72,128]{1,0:T(1,128)}', space=vmem, size = 0x9000, scoped, tag = 'internal scratch']
  %s0 = inlined_call_operand.hbm [shape: f32[8,512], index: 0, kind: input, shape index: {}]
  %s1 = inlined_call_operand.hbm [shape: f32[8,512], index: 1, kind: output, shape index: {}]
  %s2 = sld [smem:[#allocation0]]
  $region18: #{tpu_custom_call.1} parent=0
    _
  %s4 = ssub.s32 1, %s2
  %s5 = scalar_select 0, %s4, %s2
  $region1: #{tpu_custom_call.1} parent=0
    #allocation2 [shape = 'u8[16384]{0}', space=vmem, size = 0x4000, scoped, tag = 'input window, operand 0, single buffered']
    #allocation3 [shape = 's32[1]{0}', space=sflag, size = 0x4, scoped, tag = 'scoped memory for tpu_custom_call.1']
    #allocation4 [shape = 's32[1]{0}', space=sflag, size = 0x4, scoped, tag = 'scoped memory for tpu_custom_call.1']
    #allocation5 [shape = 'u8[16384]{0}', space=vmem, size = 0x4000, scoped, tag = 'output window, operand 0, single buffered']
    %6 = vsyncpa [#allocation3], 0
    %7 = vsyncpa [#allocation4], 0
    // Predicated region
    $region2: #{tpu_custom_call.1} parent=1 // pred_check
      _
    $region3: #{tpu_custom_call.1} parent=1 // pred_check_branch
      %9 = sbr.rel (0) target = $region5
    $region4: #{tpu_custom_call.1} parent=1 // pred_region
      %11 = vsyncadd [#allocation3], 0
      %s13 = sshll.u32 %s0, 4
      %s14 = int_to_ptr.hbm [resolvable:$true] %s13
      %s15 = sshll.u32 [#allocation2], 4
      %s16 = int_to_ptr.vmem [resolvable:$true] %s15
      %18 = dma.hbm_to_vmem [thread:$0]  %s14, 512, %s16, [#allocation3]
    $region5: #{tpu_custom_call.1} parent=1 // pred_fallthru
      _
    // Predicated region
    $region6: #{tpu_custom_call.1} parent=1 // pred_check
      _
    $region7: #{tpu_custom_call.1} parent=1 // pred_check_branch
      %20 = sbr.rel (0) target = $region9
    $region8: #{tpu_custom_call.1} parent=1 // pred_region
      %22 = dma.done [#allocation3], 512
    $region9: #{tpu_custom_call.1} parent=1 // pred_fallthru
      _
    %v23 = vld [vmem:[#allocation2] sm:$0xff]
    %v24 = vld [vmem:[#allocation2 + $0x8] sm:$0xff]
    %v25 = vld [vmem:[#allocation2 + $0x10] sm:$0xff]
    %v26 = vld [vmem:[#allocation2 + $0x18] sm:$0xff]
    %v27 = vadd.f32 %v23, 5.0
    %v28 = vadd.f32 %v24, 5.0
    %v29 = vadd.f32 %v25, 5.0
    %v30 = vadd.f32 %v26, 5.0
    %v31 = vmul.f32 %v27, 2.0
    %v32 = vmul.f32 %v28, 2.0
    %v33 = vmul.f32 %v29, 2.0
    %v34 = vmul.f32 %v30, 2.0
    %35 = vst [vmem:[#allocation5] sm:$0xff] %v31
    %36 = vst [vmem:[#allocation5 + $0x8] sm:$0xff] %v32
    %37 = vst [vmem:[#allocation5 + $0x10] sm:$0xff] %v33
    %38 = vst [vmem:[#allocation5 + $0x18] sm:$0xff] %v34
    // Predicated region
    $region10: #{tpu_custom_call.1} parent=1 // pred_check
      _
    $region11: #{tpu_custom_call.1} parent=1 // pred_check_branch
      %40 = sbr.rel (0) target = $region13
    $region12: #{tpu_custom_call.1} parent=1 // pred_region
      %42 = vsyncadd [#allocation4], 0
      %s44 = sshll.u32 [#allocation5], 4
      %s45 = int_to_ptr.vmem [resolvable:$true] %s44
      %s46 = sshll.u32 %s1, 4
      %s47 = int_to_ptr.hbm [resolvable:$true] %s46
      %49 = dma.vmem_to_hbm [thread:$0]  %s45, 512, %s47, [#allocation4]
    $region13: #{tpu_custom_call.1} parent=1 // pred_fallthru
      _
    // Predicated region
    $region14: #{tpu_custom_call.1} parent=1 // pred_check
      _
    $region15: #{tpu_custom_call.1} parent=1 // pred_check_branch
      %51 = sbr.rel (0) target = $region17
    $region16: #{tpu_custom_call.1} parent=1 // pred_region
      %53 = dma.done [#allocation4], 512
    $region17: #{tpu_custom_call.1} parent=1 // pred_fallthru
      _
    %54 = vsyncpa [#allocation3], 1
    %55 = vsyncpa [#allocation4], 1

</llo_original>
